<compile_context>
chip_gen: v7x
topology: tpu7x:2x2x1
jax: 0.10.0
libtpu: 0.0.40
codegen_flags: <defaults>
</compile_context>

<pallas_src>
import functools

import jax
import jax.numpy as jnp
from jax.experimental import pallas as pl
from jax.experimental.pallas import tpu as pltpu


def _clustering_kernel(x_ref, vn_ref, uvt_ref, csum_ref, ctu_ref, *,
                       K, n_rows, tile_rows, ragged, compute_stats):
    """One row-tile of the clustering forward pass (transposed UV layout).

    Outputs:
      uvt_ref  : (nc, TN)   UV_dist tile, transposed:  normalize(V) @ normalize(U).T
      csum_ref : (nc, 1)    running Coeff.sum(0)            (resident accumulator)
      ctu_ref  : (nc, C)    running Coeff.T @ normalize(U)  (resident accumulator)
    """
    i = pl.program_id(0)
    eps2 = 1e-24  # (F.normalize eps = 1e-12)^2, added inside the rsqrt

    # --- init the resident accumulators on the first grid step ---------------
    @pl.when(i == 0)
    def _():
        csum_ref[...] = jnp.zeros_like(csum_ref)
        ctu_ref[...] = jnp.zeros_like(ctu_ref)

    # --- normalize the current row tile of U ---------------------------------
    Uf = x_ref[...].astype(jnp.float32)
    if ragged and compute_stats:
        # Zero padded (out-of-bounds) rows so they cannot inject NaN/Inf into
        # the statistics matmul.  (Their UV columns are discarded anyway.)
        row = jax.lax.broadcasted_iota(jnp.int32, (tile_rows, 1), 0) + i * tile_rows
        Uf = jnp.where(row < n_rows, Uf, 0.0)
    Un = Uf * jax.lax.rsqrt(jnp.sum(Uf * Uf, axis=-1, keepdims=True) + eps2)

    # --- UV_dist tile (transposed): (nc, C) x (TN, C)^T -> (nc, TN) on the MXU -
    in_dt = x_ref.dtype
    Vn = vn_ref[...]
    if in_dt == jnp.float32:
        vn_mm, un_mm = Vn, Un
    else:  # keep bf16 inputs on the native bf16 MXU path
        vn_mm, un_mm = Vn.astype(in_dt), Un.astype(in_dt)
    uvt = jax.lax.dot_general(vn_mm, un_mm, (((1,), (1,)), ((), ())),
                              preferred_element_type=jnp.float32)
    uvt_ref[...] = uvt.astype(uvt_ref.dtype)   # lane-dense (nc, TN) store

    if not compute_stats:
        return

    # --- Coeff = softmax(K * UV_dist) over clusters (axis 0 here) ------------
    s = uvt if K == 1.0 else K * uvt
    m = jnp.max(s, axis=0, keepdims=True)               # (1, TN) sublane reduce
    e = jnp.exp(s - m)
    denom = jnp.sum(e, axis=0, keepdims=True)            # (1, TN)
    coeff = e * pl.reciprocal(denom, approx=False)        # exact: free accuracy

    if ragged:
        # Padded rows (columns here) must not contribute to the soft counts.
        col = jax.lax.broadcasted_iota(jnp.int32, (1, tile_rows), 1) + i * tile_rows
        coeff = jnp.where(col < n_rows, coeff, 0.0)

    # --- training-branch statistics, accumulated across the grid --------------
    csum_ref[...] += jnp.sum(coeff, axis=1, keepdims=True)          # lane reduce
    ctu_ref[...] += jax.lax.dot_general(                            # (nc,TN)x(TN,C)
        coeff.astype(jnp.bfloat16), Un.astype(jnp.bfloat16),
        (((1,), (0,)), ((), ())), preferred_element_type=jnp.float32)


def clustering_forward(x, V_buffer, V_count_buffer, *, K=1.0, training=True,
                       block_rows=None):
    """Pallas-backed ClusteringModule.forward.

    Returns (UV_dist, new_V_buffer, new_V_count_buffer); the buffers are only
    updated when training=True (mirroring the PyTorch module).

    block_rows: optional row-tile override.  By default the tile is derived
    from a ~2 MB-per-step byte target (2048-4096 rows for small C), which
    amortizes per-grid-step overhead while staying far under VMEM limits.
    """
    N, C = x.shape
    nc, c_v = V_buffer.shape
    assert c_v == C
    itemsize = x.dtype.itemsize

    # --- normalize V once in the wrapper (tiny; it never changes per step) ----
    Vf = V_buffer.astype(jnp.float32)
    Vn = Vf * jax.lax.rsqrt(jnp.sum(Vf * Vf, axis=-1, keepdims=True) + 1e-24)

    # --- choose the row tile ---------------------------------------------------
    # Approximate per-row VMEM cost: double-buffered x tile + f32/bf16 copies of
    # the tile (Uf, Un, Un_bf16) + softmax temporaries + double-buffered uv_t.
    per_row = 2 * C * itemsize + 10 * C + nc * (24 + 2 * itemsize)
    vmem_budget = 40 * 1024 * 1024
    max_rows_vmem = max(128, (vmem_budget // max(per_row, 1)) // 128 * 128)

    if block_rows is None:
        target = 2 * 1024 * 1024                     # ~2 MB of x per grid step
        tile_rows = max(128, min(4096, (target // max(1, C * itemsize)) // 128 * 128))
    else:
        tile_rows = max(128, ((int(block_rows) + 127) // 128) * 128)
    tile_rows = min(tile_rows, max_rows_vmem)
    if tile_rows >= N:
        tile_rows = N                                # single full-array block
    grid = (pl.cdiv(N, tile_rows),)
    ragged = (N % tile_rows) != 0

    fixed_bytes = 2 * nc * C * 4 + 2 * nc * C * 4 + 2 * nc * 4   # Vn, ctu, csum
    est = per_row * tile_rows + fixed_bytes
    vmem_limit = int(min(48 * 1024 * 1024, max(32 * 1024 * 1024, 2 * est)))

    kernel = functools.partial(_clustering_kernel, K=float(K), n_rows=N,
                               tile_rows=tile_rows, ragged=ragged,
                               compute_stats=bool(training))

    uv_t, csum, ctu = pl.pallas_call(
        kernel,
        grid=grid,
        in_specs=[
            pl.BlockSpec((tile_rows, C), lambda i: (i, 0)),   # x row tile
            pl.BlockSpec((nc, C), lambda i: (0, 0)),          # normalized V
        ],
        out_specs=(
            pl.BlockSpec((nc, tile_rows), lambda i: (0, i)),  # UV_dist^T tile
            pl.BlockSpec((nc, 1), lambda i: (0, 0)),          # csum accumulator
            pl.BlockSpec((nc, C), lambda i: (0, 0)),          # ctu accumulator
        ),
        out_shape=(
            jax.ShapeDtypeStruct((nc, N), x.dtype),
            jax.ShapeDtypeStruct((nc, 1), jnp.float32),
            jax.ShapeDtypeStruct((nc, C), jnp.float32),
        ),
        compiler_params=pltpu.CompilerParams(
            dimension_semantics=("arbitrary",),
            vmem_limit_bytes=vmem_limit,
        ),
    )(x, Vn)

    uv = uv_t.T                       # tiny (nc, N) -> (N, nc); no padded slice
    if not training:
        return uv, V_buffer, V_count_buffer

    # Tiny (num_clusters-sized) EMA buffer update stays in plain JAX glue.
    delta = csum[:, 0]                                  # (nc,)
    new_count = V_count_buffer + delta
    alpha = (delta / new_count)[:, None]                # (nc, 1)
    # PyTorch divides by the raw soft counts with no clamp; a cluster receiving
    # ~0 total softmax mass produces inf/nan exactly as the reference does.
    cur_V = ctu / delta[:, None]
    # The PyTorch EMA mixes the RAW (un-normalized) V_buffer with cur_V.
    new_V = (1.0 - alpha) * V_buffer.astype(jnp.float32) + alpha * cur_V
    return uv, new_V.astype(V_buffer.dtype), new_count.astype(V_count_buffer.dtype)


if __name__ == "__main__":
    key = jax.random.PRNGKey(0)

    def ref_forward(x, V, V_count, K):
        Un = x / jnp.maximum(jnp.linalg.norm(x, axis=-1, keepdims=True), 1e-12)
        Vn = V / jnp.maximum(jnp.linalg.norm(V, axis=-1, keepdims=True), 1e-12)
        uv = Un @ Vn.T
        coeff = jax.nn.softmax(K * uv, axis=-1)
        delta = coeff.sum(0)
        cur_V = (coeff.T @ Un) / delta[:, None]
        new_count = V_count + delta
        alpha = (delta / new_count)[:, None]
        new_V = (1.0 - alpha) * V + alpha * cur_V        # raw-buffer mix, as in PyTorch
        return uv, new_V, new_count

    k1, k2, k3, k4 = jax.random.split(key, 4)

    # --- Test 1: module defaults (K=1.0, num_clusters=2, channels=64), N=16 ---
    C, NC, N = 64, 2, 16
    V0 = jax.random.normal(k1, (NC, C), jnp.float32)
    V0 = V0 / jnp.linalg.norm(V0, axis=-1, keepdims=True)   # __init__ normalises V
    cnt0 = jnp.ones((NC,), jnp.float32)
    x1 = jax.random.normal(k2, (N, C), jnp.float32)

    uv, new_V, new_cnt = clustering_forward(x1, V0, cnt0, K=1.0, training=True)
    jax.block_until_ready((uv, new_V, new_cnt))
    r_uv, r_V, r_cnt = ref_forward(x1, V0, cnt0, 1.0)
    assert uv.shape == (N, NC)
    assert jnp.allclose(uv, r_uv, atol=1e-4), "UV_dist mismatch (test 1)"
    assert jnp.allclose(new_cnt, r_cnt, rtol=1e-3, atol=1e-3), "V_count mismatch (test 1)"
    assert jnp.allclose(new_V, r_V, rtol=2e-2, atol=2e-2), "V_buffer mismatch (test 1)"
    assert abs(float(jnp.sum(new_cnt - cnt0)) - N) < 0.05, "soft-count mass mismatch"

    # --- Test 2: ragged multi-tile path (N=300, C=96, 3 clusters, K=1.5) ------
    C2, NC2, N2 = 96, 3, 300
    V2 = jax.random.normal(k3, (NC2, C2), jnp.float32)       # un-normalised buffer
    cnt2 = 5.0 * jnp.ones((NC2,), jnp.float32)
    x2 = jax.random.normal(k4, (N2, C2), jnp.float32)

    uv2, new_V2, new_cnt2 = clustering_forward(x2, V2, cnt2, K=1.5, training=True,
                                               block_rows=128)   # force 3 tiles, ragged tail
    jax.block_until_ready((uv2, new_V2, new_cnt2))
    r_uv2, r_V2, r_cnt2 = ref_forward(x2, V2, cnt2, 1.5)
    assert uv2.shape == (N2, NC2)
    assert jnp.allclose(uv2, r_uv2, atol=1e-4), "UV_dist mismatch (test 2)"
    assert jnp.allclose(new_cnt2, r_cnt2, rtol=1e-3, atol=1e-3), "V_count mismatch (test 2)"
    # bf16 statistics matmul -> ~1e-3-level error on the EMA update
    assert jnp.allclose(new_V2, r_V2, rtol=2e-2, atol=2e-2), "V_buffer mismatch (test 2)"

    # --- eval mode: buffers untouched ------------------------------------------
    uv_e, V_e, cnt_e = clustering_forward(x1, V0, cnt0, K=1.0, training=False)
    jax.block_until_ready(uv_e)
    assert jnp.allclose(uv_e, r_uv, atol=1e-4), "UV_dist mismatch (eval)"
    assert bool(jnp.allclose(V_e, V0)) and bool(jnp.allclose(cnt_e, cnt0))

    print("KERNEL_OK")
</pallas_src>

<mosaic_0001>
module attributes {stable_mosaic.version = 11 : i64} {
  func.func @_clustering_kernel(%arg0: i32, %arg1: memref<16x64xf32, #tpu.memory_space<vmem>>, %arg2: memref<2x64xf32, #tpu.memory_space<vmem>>, %arg3: memref<2x16xf32, #tpu.memory_space<vmem>>, %arg4: memref<2x1xf32, #tpu.memory_space<vmem>>, %arg5: memref<2x64xf32, #tpu.memory_space<vmem>>) attributes {dimension_semantics = [#tpu.dimension_semantics<arbitrary>], iteration_bounds = array<i64: 1>, scalar_prefetch = 0 : i64, scratch_operands = 0 : i64, tpu.core_type = #tpu.core_type<tc>, window_params = [{transform_indices = @transform_0, window_bounds = array<i64: 16, 64>}, {pipeline_mode = #tpu.pipeline_mode<synchronous>, transform_indices = @transform_1, window_bounds = array<i64: 2, 64>}, {transform_indices = @transform_2, window_bounds = array<i64: 2, 16>}, {pipeline_mode = #tpu.pipeline_mode<synchronous>, transform_indices = @transform_3, window_bounds = array<i64: 2, 1>}, {pipeline_mode = #tpu.pipeline_mode<synchronous>, transform_indices = @transform_4, window_bounds = array<i64: 2, 64>}]} {
    %c0_i32 = arith.constant 0 : i32
    %0 = arith.cmpi eq, %arg0, %c0_i32 : i32
    %1 = arith.extui %0 : i1 to i32
    %c0_i32_0 = arith.constant 0 : i32
    %2 = arith.cmpi ne, %1, %c0_i32_0 : i32
    scf.if %2 {
      %cst_20 = arith.constant 0.000000e+00 : f32
      %36 = vector.broadcast %cst_20 : f32 to vector<2x1xf32>
      %c0_21 = arith.constant 0 : index
      %c0_22 = arith.constant 0 : index
      %37 = vector.load %arg4[%c0_21, %c0_22] : memref<2x1xf32, #tpu.memory_space<vmem>>, vector<2x1xf32>
      tpu.vector_store %arg4[%c0_21, %c0_22], %36 {strides = array<i32>} : memref<2x1xf32, #tpu.memory_space<vmem>>, vector<2x1xf32>,
      %cst_23 = arith.constant 0.000000e+00 : f32
      %38 = vector.broadcast %cst_23 : f32 to vector<2x64xf32>
      %c0_24 = arith.constant 0 : index
      %c0_25 = arith.constant 0 : index
      %39 = vector.load %arg5[%c0_24, %c0_25] : memref<2x64xf32, #tpu.memory_space<vmem>>, vector<2x64xf32>
      tpu.vector_store %arg5[%c0_24, %c0_25], %38 {strides = array<i32>} : memref<2x64xf32, #tpu.memory_space<vmem>>, vector<2x64xf32>,
    } else {
    }
    %c0 = arith.constant 0 : index
    %c0_1 = arith.constant 0 : index
    %3 = vector.load %arg1[%c0, %c0_1] : memref<16x64xf32, #tpu.memory_space<vmem>>, vector<16x64xf32>
    %4 = arith.mulf %3, %3 : vector<16x64xf32>
    %cst = arith.constant dense<0.000000e+00> : vector<16xf32>
    %5 = vector.multi_reduction <add>, %4, %cst [1] : vector<16x64xf32> to vector<16xf32>
    %6 = vector.shape_cast %5 : vector<16xf32> to vector<16x1xf32>
    %cst_2 = arith.constant 1.000000e-24 : f32
    %7 = vector.broadcast %cst_2 : f32 to vector<16x1xf32>
    %8 = arith.addf %6, %7 : vector<16x1xf32>
    %9 = math.rsqrt %8 : vector<16x1xf32>
    %10 = vector.broadcast %9 : vector<16x1xf32> to vector<16x64xf32>
    %11 = arith.mulf %3, %10 : vector<16x64xf32>
    %c0_3 = arith.constant 0 : index
    %c0_4 = arith.constant 0 : index
    %12 = vector.load %arg2[%c0_3, %c0_4] : memref<2x64xf32, #tpu.memory_space<vmem>>, vector<2x64xf32>
    %cst_5 = arith.constant dense<0.000000e+00> : vector<2x16xf32>
    %13 = tpu.matmul %12, %11, %cst_5 {dimension_numbers = #tpu.dot_dimension_numbers<[1], [1], [0], [0], [0, 0, 1, 0], [], []>} : vector<2x64xf32>, vector<16x64xf32>, vector<2x16xf32> -> vector<2x16xf32>
    %c0_6 = arith.constant 0 : index
    %c0_7 = arith.constant 0 : index
    %14 = vector.load %arg3[%c0_6, %c0_7] : memref<2x16xf32, #tpu.memory_space<vmem>>, vector<2x16xf32>
    tpu.vector_store %arg3[%c0_6, %c0_7], %13 {strides = array<i32>} : memref<2x16xf32, #tpu.memory_space<vmem>>, vector<2x16xf32>,
    %cst_8 = arith.constant dense<0xFF800000> : vector<16xf32>
    %15 = vector.multi_reduction <maximumf>, %13, %cst_8 [0] : vector<2x16xf32> to vector<16xf32>
    %16 = vector.shape_cast %15 : vector<16xf32> to vector<1x16xf32>
    %17 = vector.broadcast %16 : vector<1x16xf32> to vector<2x16xf32>
    %18 = arith.subf %13, %17 : vector<2x16xf32>
    %19 = math.exp %18 : vector<2x16xf32>
    %cst_9 = arith.constant dense<0.000000e+00> : vector<16xf32>
    %20 = vector.multi_reduction <add>, %19, %cst_9 [0] : vector<2x16xf32> to vector<16xf32>
    %21 = vector.shape_cast %20 : vector<16xf32> to vector<1x16xf32>
    %22 = tpu.reciprocal %21 : vector<1x16xf32> -> vector<1x16xf32>
    %23 = vector.broadcast %22 : vector<1x16xf32> to vector<2x16xf32>
    %24 = arith.mulf %19, %23 : vector<2x16xf32>
    %c0_10 = arith.constant 0 : index
    %c0_11 = arith.constant 0 : index
    %25 = vector.load %arg4[%c0_10, %c0_11] : memref<2x1xf32, #tpu.memory_space<vmem>>, vector<2x1xf32>
    %cst_12 = arith.constant dense<0.000000e+00> : vector<2xf32>
    %26 = vector.multi_reduction <add>, %24, %cst_12 [1] : vector<2x16xf32> to vector<2xf32>
    %27 = vector.shape_cast %26 : vector<2xf32> to vector<2x1xf32>
    %28 = arith.addf %25, %27 : vector<2x1xf32>
    %c0_13 = arith.constant 0 : index
    %c0_14 = arith.constant 0 : index
    %29 = vector.load %arg4[%c0_13, %c0_14] : memref<2x1xf32, #tpu.memory_space<vmem>>, vector<2x1xf32>
    tpu.vector_store %arg4[%c0_13, %c0_14], %28 {strides = array<i32>} : memref<2x1xf32, #tpu.memory_space<vmem>>, vector<2x1xf32>,
    %c0_15 = arith.constant 0 : index
    %c0_16 = arith.constant 0 : index
    %30 = vector.load %arg5[%c0_15, %c0_16] : memref<2x64xf32, #tpu.memory_space<vmem>>, vector<2x64xf32>
    %31 = arith.truncf %24 : vector<2x16xf32> to vector<2x16xbf16>
    %32 = arith.truncf %11 : vector<16x64xf32> to vector<16x64xbf16>
    %cst_17 = arith.constant dense<0.000000e+00> : vector<2x64xf32>
    %33 = tpu.matmul %31, %32, %cst_17 {dimension_numbers = #tpu.dot_dimension_numbers<[1], [0], [0], [1], [0, 0, 1, 1], [], []>} : vector<2x16xbf16>, vector<16x64xbf16>, vector<2x64xf32> -> vector<2x64xf32>
    %34 = arith.addf %30, %33 : vector<2x64xf32>
    %c0_18 = arith.constant 0 : index
    %c0_19 = arith.constant 0 : index
    %35 = vector.load %arg5[%c0_18, %c0_19] : memref<2x64xf32, #tpu.memory_space<vmem>>, vector<2x64xf32>
    tpu.vector_store %arg5[%c0_18, %c0_19], %34 {strides = array<i32>} : memref<2x64xf32, #tpu.memory_space<vmem>>, vector<2x64xf32>,
    return
  }
  func.func @transform_0(%arg0: i32) -> (i32, i32) {
    %c0_i32 = arith.constant 0 : i32
    %c0_i32_0 = arith.constant 0 : i32
    return %arg0, %c0_i32 : i32, i32
  }
  func.func @transform_1(%arg0: i32) -> (i32, i32) {
    %c0_i32 = arith.constant 0 : i32
    %c0_i32_0 = arith.constant 0 : i32
    %c0_i32_1 = arith.constant 0 : i32
    return %c0_i32, %c0_i32_0 : i32, i32
  }
  func.func @transform_2(%arg0: i32) -> (i32, i32) {
    %c0_i32 = arith.constant 0 : i32
    %c0_i32_0 = arith.constant 0 : i32
    return %c0_i32, %arg0 : i32, i32
  }
  func.func @transform_3(%arg0: i32) -> (i32, i32) {
    %c0_i32 = arith.constant 0 : i32
    %c0_i32_0 = arith.constant 0 : i32
    %c0_i32_1 = arith.constant 0 : i32
    return %c0_i32, %c0_i32_0 : i32, i32
  }
  func.func @transform_4(%arg0: i32) -> (i32, i32) {
    %c0_i32 = arith.constant 0 : i32
    %c0_i32_0 = arith.constant 0 : i32
    %c0_i32_1 = arith.constant 0 : i32
    return %c0_i32, %c0_i32_0 : i32, i32
  }
}

</mosaic_0001>

<llo_original>
// kernel: tpu_custom_call.1
$region0: #{tpu_custom_call.1}
  #allocation0 [shape = 'u32[]', space=smem, size = 0x4, offset = 0x4, fixed_abs, tag = 'smem constant byte address 0x4 - core index']
  #allocation1 [shape = 'u32[144,128]{1,0:T(1,128)}', space=vmem, size = 0x12000, scoped, tag = 'internal scratch']
  %s0 = inlined_call_operand.hbm [shape: f32[16,64], index: 0, kind: input, shape index: {}]
  %s1 = inlined_call_operand.vmem [shape: f32[2,64], index: 1, kind: input, shape index: {}]
  %s2 = inlined_call_operand.hbm [shape: f32[2,16], index: 2, kind: output, shape index: {0}]
  %s3 = inlined_call_operand.vmem [shape: f32[2,1], index: 3, kind: output, shape index: {1}]
  %s4 = inlined_call_operand.hbm [shape: f32[2,64], index: 4, kind: output, shape index: {2}]
  %5 = xla_tuple %s2, %s3, %s4
  %s6 = sld [smem:[#allocation0]]
  $region42: #{tpu_custom_call.1} parent=0
    _
  %s8 = ssub.s32 1, %s6
  %s9 = scalar_select 0, %s8, %s6
  $region1: #{tpu_custom_call.1} parent=0
    #allocation2 [shape = 'u8[8192]{0}', space=vmem, size = 0x2000, scoped, tag = 'input window, operand 0, single buffered']
    #allocation3 [shape = 's32[1]{0}', space=sflag, size = 0x4, scoped, tag = 'scoped memory for tpu_custom_call.1']
    #allocation4 [shape = 's32[1]{0}', space=sflag, size = 0x4, scoped, tag = 'scoped memory for tpu_custom_call.1']
    #allocation5 [shape = 'u8[1024]{0}', space=vmem, size = 0x400, scoped, tag = 'output window, operand 0, single buffered']
    #allocation6 [shape = 'u8[1024]{0}', space=vmem, size = 0x400, scoped, tag = 'output window, operand 2, single buffered']
    #allocation7 [shape = 's32[1]{0}', space=sflag, size = 0x4, scoped, tag = 'scoped memory for tpu_custom_call.1']
    %10 = vsyncpa [#allocation3], 0
    %11 = vsyncpa [#allocation4], 0
    %12 = vsyncpa [#allocation7], 0
    // Predicated region
    $region2: #{tpu_custom_call.1} parent=1 // pred_check
      _
    $region3: #{tpu_custom_call.1} parent=1 // pred_check_branch
      %14 = sbr.rel (0) target = $region5
    $region4: #{tpu_custom_call.1} parent=1 // pred_region
      %s16 = ssub.s32 256, 256
      %17 = vsyncadd [#allocation3], %s16
      %s18 = sshll.u32 [#allocation2], 4
      %s19 = int_to_ptr.vmem [resolvable:$true] %s18
      %24 = dma.hbm_to_vmem [thread:$0]  %s0, 256, %s19, [#allocation3], 128, 128, 8
    $region5: #{tpu_custom_call.1} parent=1 // pred_fallthru
      _
    // Predicated region
    $region6: #{tpu_custom_call.1} parent=1 // pred_check
      _
    $region7: #{tpu_custom_call.1} parent=1 // pred_check_branch
      %26 = sbr.rel (0) target = $region9
    $region8: #{tpu_custom_call.1} parent=1 // pred_region
      _
    $region9: #{tpu_custom_call.1} parent=1 // pred_fallthru
      _
    // Predicated region
    $region10: #{tpu_custom_call.1} parent=1 // pred_check
      _
    $region11: #{tpu_custom_call.1} parent=1 // pred_check_branch
      %28 = sbr.rel (0) target = $region13
    $region12: #{tpu_custom_call.1} parent=1 // pred_region
      %29 = dma.done [#allocation3], 256
    $region13: #{tpu_custom_call.1} parent=1 // pred_fallthru
      _
    %p31 = scmp.eq.s32.totalorder 0, 0
    // Predicated region
    $region14: #{tpu_custom_call.1} parent=1 // pred_check
      %p32 = pneg %p31
    $region15: #{tpu_custom_call.1} parent=1 // pred_check_branch
      %34 = sbr.rel (%p32) target = $region17
    $region16: #{tpu_custom_call.1} parent=1 // pred_region
      %vm35 = vcmask 1024
      %36 = vst.msk [vmem:[%s3] sm:$0x3] %vm35, 0.0
      %vm37 = vcmask 517120
      %38 = vst.msk [vmem:[#allocation6] sm:$0x3] %vm37, 0.0
    $region17: #{tpu_custom_call.1} parent=1 // pred_fallthru
      _
    %v39 = vld [vmem:[#allocation2] sm:$0xff]
    %v40 = vld [vmem:[#allocation2 + $0x8] sm:$0xff]
    %v41 = vmul.f32 %v39, %v39
    %v42 = vmul.f32 %v40, %v40
    %vm43 = vcmask 523264
    %v44 = vsel %vm43, %v41, 0.0
    %45 = vadd.xlane.f32.xlu0 %v44
    %v46 = vpop.xlane.xlu0 %45
    %v47 = vsel %vm43, %v42, 0.0
    %48 = vadd.xlane.f32.xlu0 %v47
    %v49 = vpop.xlane.xlu0 %48
    %v50 = vadd.f32 %v46, 1e-24
    %v51 = vadd.f32 %v49, 1e-24
    %v52 = vrsqrt.pop %v50
    %v53 = vrsqrt.pop %v51
    %v54 = vmul.f32 %v39, %v52
    %v55 = vmul.f32 %v40, %v53
    %v56 = vld [vmem:[%s1] sm:$0x3]
    %v58 = vsel %vm43, %v56, 0
    %v61 = vsel %vm43, %v54, 0
    %v64 = vsel %vm43, %v55, 0
    %66 = vmatprep.subr.mxu0 0.0
    %67 = vmatpush1.xpose.msra.mxu0 %v61
    %68 = vmatprep.subr.mxu0 0.0
    %69 = vmatpush1.xpose.msra.mxu0 %v64
    %70 = vmatprep.subr.mxu0 0.0
    %71 = vmatpush1.xpose.msra.mxu0 0.0
    %72 = vmatprep.subr.mxu0 0.0
    %73 = vmatpush1.xpose.msra.mxu0 0.0
    %74 = vmatprep.subr.mxu0 0.0
    %75 = vmatpush1.xpose.msra.mxu0 0.0
    %76 = vmatprep.subr.mxu0 0.0
    %77 = vmatpush1.xpose.msra.mxu0 0.0
    %78 = vmatprep.subr.mxu0 0.0
    %79 = vmatpush1.xpose.msra.mxu0 0.0
    %80 = vmatprep.subr.mxu0 0.0
    %81 = vmatpush1.xpose.msra.mxu0 0.0
    %82 = vmatprep.subr.mxu0 0.0
    %83 = vmatpush1.xpose.msra.mxu0 0.0
    %84 = vmatprep.subr.mxu0 0.0
    %85 = vmatpush1.xpose.msra.mxu0 0.0
    %86 = vmatprep.subr.mxu0 0.0
    %87 = vmatpush1.xpose.msra.mxu0 0.0
    %88 = vmatprep.subr.mxu0 0.0
    %89 = vmatpush1.xpose.msra.mxu0 0.0
    %90 = vmatprep.subr.mxu0 0.0
    %91 = vmatpush1.xpose.msra.mxu0 0.0
    %92 = vmatprep.subr.mxu0 0.0
    %93 = vmatpush1.xpose.msra.mxu0 0.0
    %94 = vmatprep.subr.mxu0 0.0
    %95 = vmatpush1.xpose.msra.mxu0 0.0
    %96 = vmatprep.subr.mxu0 0.0
    %97 = vmatpush1.xpose.msra.mxu0 0.0
    %98 = vmatprep.subr.mxu0 0.0
    %99 = vmatpush1.xpose.msra.mxu0 0.0
    %100 = vmatprep.subr.mxu0 0.0
    %101 = vmatpush1.xpose.msra.mxu0 0.0
    %102 = vmatprep.subr.mxu0 0.0
    %103 = vmatpush1.xpose.msra.mxu0 0.0
    %104 = vmatprep.subr.mxu0 0.0
    %105 = vmatpush1.xpose.msra.mxu0 0.0
    %106 = vmatprep.subr.mxu0 0.0
    %107 = vmatpush1.xpose.msra.mxu0 0.0
    %108 = vmatprep.subr.mxu0 0.0
    %109 = vmatpush1.xpose.msra.mxu0 0.0
    %110 = vmatprep.subr.mxu0 0.0
    %111 = vmatpush1.xpose.msra.mxu0 0.0
    %112 = vmatprep.subr.mxu0 0.0
    %113 = vmatpush1.xpose.msra.mxu0 0.0
    %114 = vmatprep.subr.mxu0 0.0
    %115 = vmatpush1.xpose.msra.mxu0 0.0
    %116 = vmatprep.subr.mxu0 0.0
    %117 = vmatpush1.xpose.msra.mxu0 0.0
    %118 = vmatprep.subr.mxu0 0.0
    %119 = vmatpush1.xpose.msra.mxu0 0.0
    %120 = vmatprep.subr.mxu0 0.0
    %121 = vmatpush1.xpose.msra.mxu0 0.0
    %122 = vmatprep.subr.mxu0 0.0
    %123 = vmatpush1.xpose.msra.mxu0 0.0
    %124 = vmatprep.subr.mxu0 0.0
    %125 = vmatpush1.xpose.msra.mxu0 0.0
    %126 = vmatprep.subr.mxu0 0.0
    %127 = vmatpush1.xpose.msra.mxu0 0.0
    %128 = vmatprep.subr.mxu0 0.0
    %129 = vmatpush1.xpose.msra.mxu0 0.0
    %130 = vmatprep.mubr.f32.mxu0 0.0
    %131 = vmatmul.mubr.f32.gmra.mrb[0].mxu0 %v58
    %v132 = vpop.f32.mrb[0].mxu0
    %v133 = vadd.f32 0.0, %v132
    %v134 = vpop.f32.mrb[0].mxu0
    %135 = vdwg.mxu0
    %vm136 = vcmask 123904
    %137 = vst.msk [vmem:[#allocation5] sm:$0x3] %vm136, %v133
    %v138 = vsel %vm136, %v133, -inf
    %v139 = vrot.slane %v138, 4
    %v140 = vmax.f32 %v138, %v139
    %v141 = vrot.slane %v140, 2
    %v142 = vmax.f32 %v140, %v141
    %v143 = vrot.slane %v142, 1
    %v144 = vmax.f32 %v142, %v143
    %v145 = vsub.f32 %v133, %v144
    %v146 = vmul.f32 %v145, 1.442695
    %v147 = vpow.pop %v146
    %v148 = vsel %vm136, %v147, 0.0
    %v149 = vrot.slane %v148, 4
    %v150 = vadd.f32 %v148, %v149
    %v151 = vrot.slane %v150, 2
    %v152 = vadd.f32 %v150, %v151
    %v153 = vrot.slane %v152, 1
    %v154 = vadd.f32 %v152, %v153
    %v155 = vrcp.pop %v154
    %v156 = vmul.f32 %v147, %v155
    %v157 = vld [vmem:[%s3] sm:$0x3]
    %v158 = vsel %vm136, %v156, 0.0
    %159 = vadd.xlane.f32.xlu0 %v158
    %v160 = vpop.xlane.xlu0 %159
    %v161 = vadd.f32 %v157, %v160
    %vm162 = vcmask 1024
    %163 = vst.msk [vmem:[%s3] sm:$0x3] %vm162, %v161
    %v164 = vld [vmem:[#allocation6] sm:$0x3]
    %v165 = vpack.c.bf16 %v156, %v156
    %v166 = vpack.c.bf16 %v55, %v54
    %vm167 = vcmask 130048
    %v169 = vsel %vm167, %v165, 0
    %171 = vmatprep.subr.bf16.mxu0 0
    %172 = vmatpush1.bf16.msra.mxu0 %v166
    %173 = vmatprep.subr.bf16.mxu0 0
    %174 = vmatpush1.bf16.msra.mxu0 0
    %175 = vmatprep.subr.bf16.mxu0 0
    %176 = vmatpush1.bf16.msra.mxu0 0
    %177 = vmatprep.subr.bf16.mxu0 0
    %178 = vmatpush1.bf16.msra.mxu0 0
    %179 = vmatprep.subr.bf16.mxu0 0
    %180 = vmatpush1.bf16.msra.mxu0 0
    %181 = vmatprep.subr.bf16.mxu0 0
    %182 = vmatpush1.bf16.msra.mxu0 0
    %183 = vmatprep.subr.bf16.mxu0 0
    %184 = vmatpush1.bf16.msra.mxu0 0
    %185 = vmatprep.subr.bf16.mxu0 0
    %186 = vmatpush1.bf16.msra.mxu0 0
    %187 = vmatprep.subr.bf16.mxu0 0
    %188 = vmatpush1.bf16.msra.mxu0 0
    %189 = vmatprep.subr.bf16.mxu0 0
    %190 = vmatpush1.bf16.msra.mxu0 0
    %191 = vmatprep.subr.bf16.mxu0 0
    %192 = vmatpush1.bf16.msra.mxu0 0
    %193 = vmatprep.subr.bf16.mxu0 0
    %194 = vmatpush1.bf16.msra.mxu0 0
    %195 = vmatprep.subr.bf16.mxu0 0
    %196 = vmatpush1.bf16.msra.mxu0 0
    %197 = vmatprep.subr.bf16.mxu0 0
    %198 = vmatpush1.bf16.msra.mxu0 0
    %199 = vmatprep.subr.bf16.mxu0 0
    %200 = vmatpush1.bf16.msra.mxu0 0
    %201 = vmatprep.subr.bf16.mxu0 0
    %202 = vmatpush1.bf16.msra.mxu0 0
    %203 = vmatprep.mubr.bf16.mxu0 0
    %204 = vmatmul.mubr.bf16.gmra.mrb[0].mxu0 %v169
    %v205 = vpop.f32.mrb[0].mxu0
    %v206 = vadd.f32 0.0, %v205
    %v207 = vpop.f32.mrb[0].mxu0
    %v208 = vpop.f32.mrb[0].mxu0
    %v209 = vpop.f32.mrb[0].mxu0
    %210 = vdwg.mxu0
    %v211 = vadd.f32 %v164, %v206
    %vm212 = vcmask 517120
    %213 = vst.msk [vmem:[#allocation6] sm:$0x3] %vm212, %v211
    // Predicated region
    $region18: #{tpu_custom_call.1} parent=1 // pred_check
      _
    $region19: #{tpu_custom_call.1} parent=1 // pred_check_branch
      %215 = sbr.rel (0) target = $region21
    $region20: #{tpu_custom_call.1} parent=1 // pred_region
      %s217 = ssub.s32 32, 32
      %218 = vsyncadd [#allocation4], %s217
      %s220 = sshll.u32 [#allocation5], 4
      %s221 = int_to_ptr.vmem [resolvable:$true] %s220
      %223 = dma.vmem_to_hbm [thread:$0]  %s221, 32, %s2, [#allocation4]
    $region21: #{tpu_custom_call.1} parent=1 // pred_fallthru
      _
    // Predicated region
    $region22: #{tpu_custom_call.1} parent=1 // pred_check
      _
    $region23: #{tpu_custom_call.1} parent=1 // pred_check_branch
      %225 = sbr.rel (0) target = $region25
    $region24: #{tpu_custom_call.1} parent=1 // pred_region
      _
    $region25: #{tpu_custom_call.1} parent=1 // pred_fallthru
      _
    // Predicated region
    $region26: #{tpu_custom_call.1} parent=1 // pred_check
      _
    $region27: #{tpu_custom_call.1} parent=1 // pred_check_branch
      %227 = sbr.rel (0) target = $region29
    $region28: #{tpu_custom_call.1} parent=1 // pred_region
      %s229 = ssub.s32 32, 32
      %230 = vsyncadd [#allocation7], %s229
      %s232 = sshll.u32 [#allocation6], 4
      %s233 = int_to_ptr.vmem [resolvable:$true] %s232
      %235 = dma.vmem_to_hbm [thread:$0]  %s233, 32, %s4, [#allocation7]
    $region29: #{tpu_custom_call.1} parent=1 // pred_fallthru
      _
    // Predicated region
    $region30: #{tpu_custom_call.1} parent=1 // pred_check
      _
    $region31: #{tpu_custom_call.1} parent=1 // pred_check_branch
      %237 = sbr.rel (0) target = $region33
    $region32: #{tpu_custom_call.1} parent=1 // pred_region
      %238 = dma.done [#allocation4], 32
    $region33: #{tpu_custom_call.1} parent=1 // pred_fallthru
      _
    // Predicated region
    $region34: #{tpu_custom_call.1} parent=1 // pred_check
      _
    $region35: #{tpu_custom_call.1} parent=1 // pred_check_branch
      %240 = sbr.rel (0) target = $region37
    $region36: #{tpu_custom_call.1} parent=1 // pred_region
      _
    $region37: #{tpu_custom_call.1} parent=1 // pred_fallthru
      _
    // Predicated region
    $region38: #{tpu_custom_call.1} parent=1 // pred_check
      _
    $region39: #{tpu_custom_call.1} parent=1 // pred_check_branch
      %242 = sbr.rel (0) target = $region41
    $region40: #{tpu_custom_call.1} parent=1 // pred_region
      %243 = dma.done [#allocation7], 32
    $region41: #{tpu_custom_call.1} parent=1 // pred_fallthru
      _
    %244 = vsyncpa [#allocation3], 1
    %245 = vsyncpa [#allocation4], 1
    %246 = vsyncpa [#allocation7], 1

</llo_original>
